<compile_context>
chip_gen: v7x
topology: tpu7x:2x2x1
jax: 0.10.0
libtpu: 0.0.40
codegen_flags: <defaults>
</compile_context>

<pallas_src>
import functools

import jax
import jax.numpy as jnp
from jax.experimental import pallas as pl
from jax.experimental.pallas import tpu as pltpu


# ---------------------------------------------------------------------------
# Small helpers
# ---------------------------------------------------------------------------
def _round_up(v, m):
    return (v + m - 1) // m * m


def _pick_tm(mp):
    # mp is a multiple of 128.  Prefer large tiles, but keep >= 2 grid steps so the
    # "parallel" axis can be split across the two TensorCores on v7x.
    for tm in (512, 256, 128, 64):
        if mp % tm == 0 and mp // tm >= 2:
            return tm
    return mp


def _pick_tk(k):
    for tk in (512, 256, 128):
        if k % tk == 0:
            return tk
    return k


_MM_COMPILER_PARAMS = pltpu.CompilerParams(
    dimension_semantics=("parallel", "arbitrary"),
    vmem_limit_bytes=48 * 1024 * 1024,
)
_CONV2_COMPILER_PARAMS = pltpu.CompilerParams(
    dimension_semantics=("parallel",),
    vmem_limit_bytes=48 * 1024 * 1024,
)


# ---------------------------------------------------------------------------
# Pallas kernels: fused (matmul -> BN affine -> [+residual] -> [relu])
# with a K-reduction grid axis and an f32 VMEM accumulator.
# ---------------------------------------------------------------------------
def _mm_bn_kernel(x_ref, w_ref, s_ref, b_ref, o_ref, acc_ref, *, relu):
    k = pl.program_id(1)

    @pl.when(k == 0)
    def _init():
        acc_ref[...] = jnp.zeros_like(acc_ref)

    acc_ref[...] += jnp.dot(x_ref[...], w_ref[...],
                            preferred_element_type=jnp.float32)

    @pl.when(k == pl.num_programs(1) - 1)
    def _finish():
        y = acc_ref[...] * s_ref[...] + b_ref[...]
        if relu:
            y = jnp.maximum(y, 0.0)
        o_ref[...] = y.astype(o_ref.dtype)


def _mm_bn_res_relu_kernel(x_ref, w_ref, s_ref, b_ref, r_ref, o_ref, acc_ref):
    k = pl.program_id(1)

    @pl.when(k == 0)
    def _init():
        acc_ref[...] = jnp.zeros_like(acc_ref)

    acc_ref[...] += jnp.dot(x_ref[...], w_ref[...],
                            preferred_element_type=jnp.float32)

    @pl.when(k == pl.num_programs(1) - 1)
    def _finish():
        y = acc_ref[...] * s_ref[...] + b_ref[...]
        y = y + r_ref[...].astype(jnp.float32)
        o_ref[...] = jnp.maximum(y, 0.0).astype(o_ref.dtype)


def matmul_bn(x2d, w, scale, bias, *, relu, residual=None, out_dtype=jnp.bfloat16):
    """relu_opt((x2d @ w) * scale + bias [+ residual]).

    x2d: (M, K) bf16, w: (K, N) bf16 with K, N multiples of 128.
    M is padded up to a tile multiple internally; padded rows are sliced off.
    """
    M, K = x2d.shape
    _, Nc = w.shape
    Mp = _round_up(M, 128)
    if Mp != M:
        x2d = jnp.pad(x2d, ((0, Mp - M), (0, 0)))
        if residual is not None:
            residual = jnp.pad(residual, ((0, Mp - M), (0, 0)))
    TM = _pick_tm(Mp)
    TK = _pick_tk(K)
    grid = (Mp // TM, K // TK)

    in_specs = [
        pl.BlockSpec((TM, TK), lambda i, k: (i, k)),
        pl.BlockSpec((TK, Nc), lambda i, k: (k, 0)),
        pl.BlockSpec((1, Nc), lambda i, k: (0, 0)),
        pl.BlockSpec((1, Nc), lambda i, k: (0, 0)),
    ]
    args = [x2d, w, scale, bias]
    if residual is None:
        kernel = functools.partial(_mm_bn_kernel, relu=relu)
    else:
        in_specs.append(pl.BlockSpec((TM, Nc), lambda i, k: (i, 0)))
        args.append(residual)
        kernel = _mm_bn_res_relu_kernel  # residual path always ends in relu

    out = pl.pallas_call(
        kernel,
        out_shape=jax.ShapeDtypeStruct((Mp, Nc), out_dtype),
        grid=grid,
        in_specs=in_specs,
        out_specs=pl.BlockSpec((TM, Nc), lambda i, k: (i, 0)),
        scratch_shapes=[pltpu.VMEM((TM, Nc), jnp.float32)],
        compiler_params=_MM_COMPILER_PARAMS,
    )(*args)
    return out[:M] if Mp != M else out


# ---------------------------------------------------------------------------
# Pallas kernel: 3x3 conv (stride s, pad 1) + BN + relu, no im2col.
# Input arrives as the s*s polyphase decomposition of the padded activations;
# every tap (dh, dw) is then a contiguous (Ho, Wo) window of one phase.
# ---------------------------------------------------------------------------
def _conv3x3_bn_relu_kernel(x_ref, w_ref, s_ref, b_ref, o_ref, *, stride, Ho, Wo):
    # x_ref: (s*s, Hq, Wq, Cp) bf16 (one batch element, resident in VMEM)
    # w_ref: (9, Cp, Co) bf16, s_ref/b_ref: (1, Co) f32, o_ref: (Ho, Wo, Co)
    cp = x_ref.shape[-1]
    co = w_ref.shape[-1]
    acc = jnp.zeros((Ho * Wo, co), jnp.float32)
    for dh in range(3):
        for dw in range(3):
            ph = (dh % stride) * stride + (dw % stride)   # which polyphase
            qh = dh // stride                             # contiguous offset in it
            qw = dw // stride
            tap = x_ref[ph, qh:qh + Ho, qw:qw + Wo, :]    # static, contiguous slice
            acc = acc + jnp.dot(tap.reshape(Ho * Wo, cp), w_ref[dh * 3 + dw],
                                preferred_element_type=jnp.float32)
    y = acc * s_ref[...] + b_ref[...]
    y = jnp.maximum(y, 0.0)
    o_ref[...] = y.reshape(Ho, Wo, co).astype(o_ref.dtype)


def conv3x3_bn_relu(xpp, w9, scale, bias, *, stride, Ho, Wo, out_dtype=jnp.bfloat16):
    """xpp: (N, s*s, Hq, Wq, Cp) bf16 polyphase input; w9: (9, Cp, Co) bf16."""
    N, S2, Hq, Wq, Cp = xpp.shape
    Co = w9.shape[-1]
    kernel = functools.partial(_conv3x3_bn_relu_kernel, stride=stride, Ho=Ho, Wo=Wo)
    return pl.pallas_call(
        kernel,
        out_shape=jax.ShapeDtypeStruct((N, Ho, Wo, Co), out_dtype),
        grid=(N,),
        in_specs=[
            pl.BlockSpec((None, S2, Hq, Wq, Cp), lambda n: (n, 0, 0, 0, 0)),
            pl.BlockSpec((9, Cp, Co), lambda n: (0, 0, 0)),
            pl.BlockSpec((1, Co), lambda n: (0, 0)),
            pl.BlockSpec((1, Co), lambda n: (0, 0)),
        ],
        out_specs=pl.BlockSpec((None, Ho, Wo, Co), lambda n: (n, 0, 0, 0)),
        compiler_params=_CONV2_COMPILER_PARAMS,
    )(xpp, w9, scale, bias)


# ---------------------------------------------------------------------------
# Glue: BN folding (with channel padding), polyphase split, parameter init
# ---------------------------------------------------------------------------
def fold_bn_padded(gamma, beta, mean, var, cp, eps=1e-5):
    scale = gamma / jnp.sqrt(var + eps)
    bias = beta - mean * scale
    c = scale.shape[0]
    scale = jnp.pad(scale, (0, cp - c))   # padded channels -> exactly 0 output
    bias = jnp.pad(bias, (0, cp - c))
    return (scale.reshape(1, cp).astype(jnp.float32),
            bias.reshape(1, cp).astype(jnp.float32))


def _pad2d(w, kp, np_):
    k, n = w.shape
    return jnp.pad(w, ((0, kp - k), (0, np_ - n))).astype(jnp.bfloat16)


def _polyphase(xp, s):
    """Split spatially-padded NHWC activations into their s*s stride phases.

    Phase (rh, rw) = xp[:, rh::s, rw::s, :].  With it, every tap (dh, dw) of a
    stride-s 3x3 conv is a contiguous (Ho, Wo) window of one phase, so the kernel
    needs neither im2col nor strided loads.  Total HBM size ~= 1x the input.
    """
    if s == 1:
        return xp[:, None]
    N, Hp, Wp, C = xp.shape
    Hq = -(-Hp // s)
    Wq = -(-Wp // s)
    phases = []
    for rh in range(s):
        for rw in range(s):
            p = xp[:, rh::s, rw::s, :]
            p = jnp.pad(p, ((0, 0), (0, Hq - p.shape[1]), (0, Wq - p.shape[2]), (0, 0)))
            phases.append(p)
    return jnp.stack(phases, axis=1)   # (N, s*s, Hq, Wq, C)


def init_bottleneck_params(key, in_planes, planes, stride):
    expansion = 4
    out_planes = expansion * planes
    ks = jax.random.split(key, 8)

    def conv_w(k, shape, fan_in):
        return jax.random.normal(k, shape, jnp.float32) * (1.0 / jnp.sqrt(fan_in))

    def bn_p(k, c):
        k1, k2, k3, k4 = jax.random.split(k, 4)
        gamma = 1.0 + 0.1 * jax.random.normal(k1, (c,), jnp.float32)
        beta = 0.1 * jax.random.normal(k2, (c,), jnp.float32)
        mean = 0.1 * jax.random.normal(k3, (c,), jnp.float32)
        var = 1.0 + 0.1 * jax.random.uniform(k4, (c,), jnp.float32)
        return gamma, beta, mean, var

    params = {
        # 1x1 convs stored as (Cin, Cout); 3x3 conv stored as (kh, kw, Cin, Cout)
        "w1": conv_w(ks[0], (in_planes, planes), in_planes),
        "bn1": bn_p(ks[1], planes),
        "w2": conv_w(ks[2], (3, 3, planes, planes), 9 * planes),
        "bn2": bn_p(ks[3], planes),
        "w3": conv_w(ks[4], (planes, out_planes), planes),
        "bn3": bn_p(ks[5], out_planes),
    }
    params["has_shortcut"] = (stride != 1) or (in_planes != out_planes)
    if params["has_shortcut"]:
        params["ws"] = conv_w(ks[6], (in_planes, out_planes), in_planes)
        params["bns"] = bn_p(ks[7], out_planes)
    return params


# ---------------------------------------------------------------------------
# Forward pass (NCHW in / NCHW out, matching the PyTorch module)
# ---------------------------------------------------------------------------
def bottleneck_forward(x_nchw, params, stride):
    # TODO(synk): fold the NCHW<->NHWC transposes and the shortcut's strided spatial
    # subsample into BlockSpec index_maps to shave a few small XLA glue passes.
    x = jnp.transpose(x_nchw, (0, 2, 3, 1)).astype(jnp.float32)    # -> NHWC
    N, H, W, cin = x.shape
    planes = params["w1"].shape[1]
    out_planes = params["w3"].shape[1]

    cin_p = _round_up(cin, 128)       # lane-dense channel padding everywhere
    pl_p = _round_up(planes, 128)
    op_p = _round_up(out_planes, 128)

    x_p = jnp.pad(x, ((0, 0), (0, 0), (0, 0), (0, cin_p - cin))).astype(jnp.bfloat16)

    # conv1 (1x1) + bn1 + relu
    w1 = _pad2d(params["w1"], cin_p, pl_p)
    s1, b1 = fold_bn_padded(*params["bn1"], pl_p)
    out1 = matmul_bn(x_p.reshape(N * H * W, cin_p), w1, s1, b1, relu=True)
    out1 = out1.reshape(N, H, W, pl_p)                             # bf16

    # conv2 (3x3, stride, pad=1) + bn2 + relu  (polyphase + in-kernel 9-tap reduction)
    Ho = (H - 1) // stride + 1
    Wo = (W - 1) // stride + 1
    xp = jnp.pad(out1, ((0, 0), (1, 1), (1, 1), (0, 0)))           # spatial pad=1
    xpp = _polyphase(xp, stride)                                   # (N, s*s, Hq, Wq, Cp)
    w2 = jnp.pad(params["w2"],
                 ((0, 0), (0, 0), (0, pl_p - planes), (0, pl_p - planes)))
    w2 = w2.reshape(9, pl_p, pl_p).astype(jnp.bfloat16)
    s2, b2 = fold_bn_padded(*params["bn2"], pl_p)
    out2 = conv3x3_bn_relu(xpp, w2, s2, b2, stride=stride, Ho=Ho, Wo=Wo)
    out2 = out2.reshape(N * Ho * Wo, pl_p)                         # bf16

    # shortcut branch
    if params["has_shortcut"]:
        xs = x_p[:, ::stride, ::stride, :].reshape(N * Ho * Wo, cin_p)
        ws = _pad2d(params["ws"], cin_p, op_p)
        ss, bs = fold_bn_padded(*params["bns"], op_p)
        shortcut = matmul_bn(xs, ws, ss, bs, relu=False)
    else:
        shortcut = x_p.reshape(N * Ho * Wo, op_p)

    # conv3 (1x1) + bn3 + residual add + relu (fully fused epilogue)
    w3 = _pad2d(params["w3"], pl_p, op_p)
    s3, b3 = fold_bn_padded(*params["bn3"], op_p)
    out3 = matmul_bn(out2, w3, s3, b3, relu=True, residual=shortcut,
                     out_dtype=jnp.float32)

    out = out3.reshape(N, Ho, Wo, op_p)[..., :out_planes]
    return jnp.transpose(out, (0, 3, 1, 2))                        # -> NCHW


# ---------------------------------------------------------------------------
# Pure-JAX f32 reference (same math, lax convs) for a sanity check
# ---------------------------------------------------------------------------
def bottleneck_reference(x_nchw, params, stride):
    x = x_nchw.astype(jnp.float32)

    def conv1x1(inp, w, st=1):  # w: (Cin, Cout)
        wk = w.T[:, :, None, None]
        return jax.lax.conv_general_dilated(inp, wk, (st, st), "VALID",
                                            dimension_numbers=("NCHW", "OIHW", "NCHW"))

    def conv3x3(inp, w, st):  # w: (kh, kw, Cin, Cout)
        wk = jnp.transpose(w, (3, 2, 0, 1))
        return jax.lax.conv_general_dilated(inp, wk, (st, st), ((1, 1), (1, 1)),
                                            dimension_numbers=("NCHW", "OIHW", "NCHW"))

    def bn(inp, p):
        g, b, m, v = p
        sc = (g / jnp.sqrt(v + 1e-5)).reshape(1, -1, 1, 1)
        bi = (b - m * g / jnp.sqrt(v + 1e-5)).reshape(1, -1, 1, 1)
        return inp * sc + bi

    out = jax.nn.relu(bn(conv1x1(x, params["w1"]), params["bn1"]))
    out = jax.nn.relu(bn(conv3x3(out, params["w2"], stride), params["bn2"]))
    out = bn(conv1x1(out, params["w3"]), params["bn3"])
    if params["has_shortcut"]:
        sc = bn(conv1x1(x, params["ws"], stride), params["bns"])
    else:
        sc = x
    return jax.nn.relu(out + sc)


if __name__ == "__main__":
    key = jax.random.PRNGKey(0)
    k_x, k_p = jax.random.split(key)

    # Small shapes: in_planes=16, planes=8, stride=2 -> projection shortcut active.
    in_planes, planes, stride = 16, 8, 2
    x = jax.random.normal(k_x, (2, in_planes, 16, 16), jnp.float32)  # NCHW

    params = init_bottleneck_params(k_p, in_planes, planes, stride)

    out = jax.block_until_ready(bottleneck_forward(x, params, stride))
    ref = jax.block_until_ready(bottleneck_reference(x, params, stride))

    assert out.shape == (2, 4 * planes, 8, 8), out.shape
    max_err = float(jnp.max(jnp.abs(out - ref)))
    # bf16 MXU inputs / bf16 intermediates -> loosened tolerance vs the f32 reference.
    assert jnp.allclose(out, ref, atol=6e-2, rtol=6e-2), max_err

    print("KERNEL_OK")
</pallas_src>

<mosaic_0001>
module attributes {stable_mosaic.version = 11 : i64} {
  func.func @_mm_bn_kernel(%arg0: i32, %arg1: i32, %arg2: memref<256x128xbf16, #tpu.memory_space<vmem>>, %arg3: memref<128x128xbf16, #tpu.memory_space<vmem>>, %arg4: memref<1x128xf32, #tpu.memory_space<vmem>>, %arg5: memref<1x128xf32, #tpu.memory_space<vmem>>, %arg6: memref<256x128xbf16, #tpu.memory_space<vmem>>, %arg7: memref<256x128xf32, #tpu.memory_space<vmem>>) attributes {dimension_semantics = [#tpu.dimension_semantics<parallel>, #tpu.dimension_semantics<arbitrary>], iteration_bounds = array<i64: 2, 1>, scalar_prefetch = 0 : i64, scratch_operands = 1 : i64, tpu.core_type = #tpu.core_type<tc>, window_params = [{transform_indices = @transform_0, window_bounds = array<i64: 256, 128>}, {transform_indices = @transform_1, window_bounds = array<i64: 128, 128>}, {pipeline_mode = #tpu.pipeline_mode<synchronous>, transform_indices = @transform_2, window_bounds = array<i64: 1, 128>}, {pipeline_mode = #tpu.pipeline_mode<synchronous>, transform_indices = @transform_3, window_bounds = array<i64: 1, 128>}, {transform_indices = @transform_4, window_bounds = array<i64: 256, 128>}]} {
    %c0_i32 = arith.constant 0 : i32
    %0 = arith.cmpi eq, %arg1, %c0_i32 : i32
    %1 = arith.extui %0 : i1 to i32
    %c0_i32_0 = arith.constant 0 : i32
    %2 = arith.cmpi ne, %1, %c0_i32_0 : i32
    scf.if %2 {
      %cst_10 = arith.constant 0.000000e+00 : f32
      %12 = vector.broadcast %cst_10 : f32 to vector<256x128xf32>
      %c0_11 = arith.constant 0 : index
      %c0_12 = arith.constant 0 : index
      %13 = vector.load %arg7[%c0_11, %c0_12] : memref<256x128xf32, #tpu.memory_space<vmem>>, vector<256x128xf32>
      tpu.vector_store %arg7[%c0_11, %c0_12], %12 {strides = array<i32>} : memref<256x128xf32, #tpu.memory_space<vmem>>, vector<256x128xf32>,
    } else {
    }
    %c0 = arith.constant 0 : index
    %c0_1 = arith.constant 0 : index
    %3 = vector.load %arg7[%c0, %c0_1] : memref<256x128xf32, #tpu.memory_space<vmem>>, vector<256x128xf32>
    %c0_2 = arith.constant 0 : index
    %c0_3 = arith.constant 0 : index
    %4 = vector.load %arg2[%c0_2, %c0_3] : memref<256x128xbf16, #tpu.memory_space<vmem>>, vector<256x128xbf16>
    %c0_4 = arith.constant 0 : index
    %c0_5 = arith.constant 0 : index
    %5 = vector.load %arg3[%c0_4, %c0_5] : memref<128x128xbf16, #tpu.memory_space<vmem>>, vector<128x128xbf16>
    %cst = arith.constant dense<0.000000e+00> : vector<256x128xf32>
    %6 = tpu.matmul %4, %5, %cst {dimension_numbers = #tpu.dot_dimension_numbers<[1], [0], [0], [1], [0, 0, 1, 1], [], []>} : vector<256x128xbf16>, vector<128x128xbf16>, vector<256x128xf32> -> vector<256x128xf32>
    %7 = arith.addf %3, %6 : vector<256x128xf32>
    %c0_6 = arith.constant 0 : index
    %c0_7 = arith.constant 0 : index
    %8 = vector.load %arg7[%c0_6, %c0_7] : memref<256x128xf32, #tpu.memory_space<vmem>>, vector<256x128xf32>
    tpu.vector_store %arg7[%c0_6, %c0_7], %7 {strides = array<i32>} : memref<256x128xf32, #tpu.memory_space<vmem>>, vector<256x128xf32>,
    %c0_i32_8 = arith.constant 0 : i32
    %9 = arith.cmpi eq, %arg1, %c0_i32_8 : i32
    %10 = arith.extui %9 : i1 to i32
    %c0_i32_9 = arith.constant 0 : i32
    %11 = arith.cmpi ne, %10, %c0_i32_9 : i32
    scf.if %11 {
      %c0_10 = arith.constant 0 : index
      %c0_11 = arith.constant 0 : index
      %12 = vector.load %arg7[%c0_10, %c0_11] : memref<256x128xf32, #tpu.memory_space<vmem>>, vector<256x128xf32>
      %c0_12 = arith.constant 0 : index
      %c0_13 = arith.constant 0 : index
      %13 = vector.load %arg4[%c0_12, %c0_13] : memref<1x128xf32, #tpu.memory_space<vmem>>, vector<1x128xf32>
      %14 = vector.broadcast %13 : vector<1x128xf32> to vector<256x128xf32>
      %15 = arith.mulf %12, %14 : vector<256x128xf32>
      %c0_14 = arith.constant 0 : index
      %c0_15 = arith.constant 0 : index
      %16 = vector.load %arg5[%c0_14, %c0_15] : memref<1x128xf32, #tpu.memory_space<vmem>>, vector<1x128xf32>
      %17 = vector.broadcast %16 : vector<1x128xf32> to vector<256x128xf32>
      %18 = arith.addf %15, %17 : vector<256x128xf32>
      %cst_16 = arith.constant 0.000000e+00 : f32
      %19 = vector.broadcast %cst_16 : f32 to vector<256x128xf32>
      %20 = arith.maximumf %18, %19 : vector<256x128xf32>
      %21 = arith.truncf %20 : vector<256x128xf32> to vector<256x128xbf16>
      %c0_17 = arith.constant 0 : index
      %c0_18 = arith.constant 0 : index
      %22 = vector.load %arg6[%c0_17, %c0_18] : memref<256x128xbf16, #tpu.memory_space<vmem>>, vector<256x128xbf16>
      tpu.vector_store %arg6[%c0_17, %c0_18], %21 {strides = array<i32>} : memref<256x128xbf16, #tpu.memory_space<vmem>>, vector<256x128xbf16>,
    } else {
    }
    return
  }
  func.func @transform_0(%arg0: i32, %arg1: i32) -> (i32, i32) {
    %c0_i32 = arith.constant 0 : i32
    return %arg0, %arg1 : i32, i32
  }
  func.func @transform_1(%arg0: i32, %arg1: i32) -> (i32, i32) {
    %c0_i32 = arith.constant 0 : i32
    %c0_i32_0 = arith.constant 0 : i32
    return %arg1, %c0_i32 : i32, i32
  }
  func.func @transform_2(%arg0: i32, %arg1: i32) -> (i32, i32) {
    %c0_i32 = arith.constant 0 : i32
    %c0_i32_0 = arith.constant 0 : i32
    %c0_i32_1 = arith.constant 0 : i32
    return %c0_i32, %c0_i32_0 : i32, i32
  }
  func.func @transform_3(%arg0: i32, %arg1: i32) -> (i32, i32) {
    %c0_i32 = arith.constant 0 : i32
    %c0_i32_0 = arith.constant 0 : i32
    %c0_i32_1 = arith.constant 0 : i32
    return %c0_i32, %c0_i32_0 : i32, i32
  }
  func.func @transform_4(%arg0: i32, %arg1: i32) -> (i32, i32) {
    %c0_i32 = arith.constant 0 : i32
    %c0_i32_0 = arith.constant 0 : i32
    return %arg0, %c0_i32 : i32, i32
  }
}

</mosaic_0001>

<llo_original>
// kernel: tpu_custom_call.1
$region0: #{tpu_custom_call.1}
  #allocation0 [shape = 'u32[]', space=smem, size = 0x4, offset = 0x4, fixed_abs, tag = 'smem constant byte address 0x4 - core index']
  #allocation1 [shape = 'u32[144,128]{1,0:T(1,128)}', space=vmem, size = 0x12000, scoped, tag = 'internal scratch']
  #allocation2 [shape = 'f32[256,128]{1,0:T(8,128)}', space=vmem, size = 0x20000, scoped, tag = 'scratch operand']
  %s0 = inlined_call_operand.hbm [shape: bf16[512,128], index: 0, kind: input, shape index: {}]
  %s1 = inlined_call_operand.hbm [shape: bf16[128,128], index: 1, kind: input, shape index: {}]
  %s2 = inlined_call_operand.vmem [shape: f32[1,128], index: 2, kind: input, shape index: {}]
  %s3 = inlined_call_operand.vmem [shape: f32[1,128], index: 3, kind: input, shape index: {}]
  %s4 = inlined_call_operand.hbm [shape: bf16[512,128], index: 4, kind: output, shape index: {}]
  %s5 = sld [smem:[#allocation0]]
  $region65: #{tpu_custom_call.1} parent=0
    _
  %s7 = ssub.s32 1, %s5
  %s8 = scalar_select 0, %s7, %s5
  $region1: #{tpu_custom_call.1} parent=0
    #allocation3 [shape = 'u8[131072]{0}', space=vmem, size = 0x20000, scoped, tag = 'input window, operand 0']
    #allocation4 [shape = 's32[2]{0}', space=sflag, size = 0x8, scoped, tag = 'scoped memory for tpu_custom_call.1']
    #allocation5 [shape = 's32[2]{0}', space=sflag, size = 0x8, scoped, tag = 'scoped memory for tpu_custom_call.1']
    #allocation6 [shape = 'u8[32768]{0}', space=vmem, size = 0x8000, scoped, tag = 'input window, operand 1, single buffered']
    #allocation7 [shape = 's32[1]{0}', space=sflag, size = 0x4, scoped, tag = 'scoped memory for tpu_custom_call.1']
    #allocation8 [shape = 'u8[131072]{0}', space=vmem, size = 0x20000, scoped, tag = 'output window, operand 0']
    %9 = vsyncpa [#allocation4], 0
    %s10 = scalar_lea.sflag [#allocation4], 1
    %11 = vsyncpa %s10, 0
    %12 = vsyncpa [#allocation7], 0
    %13 = vsyncpa [#allocation5], 0
    %s14 = scalar_lea.sflag [#allocation5], 1
    %15 = vsyncpa %s14, 0
    loop: start=0, step=1, limit=4
    $region2: #{tpu_custom_call.1} parent=1 // loop_pre_header
      _
    $region3: #{tpu_custom_call.1} parent=1 // loop_header
      %s17 = sphi 0, %s21
      %p18 = scmp.ge.s32.totalorder %s17, 4
      %s24 = sphi 0, %s36
      %s25 = sphi 0, %s32
      %s26 = sphi 0, %s24
      %s27 = sphi 0, %s25
      %s28 = sphi 0, %s26
      %s29 = sphi 0, %s27
      %s41 = sphi 0, %s43
      %s44 = sphi 0, %s41
      %s45 = sphi 0, %s44
      %s61 = sphi 0, %s45
      %s67 = sphi 0, %s69
      %s70 = sphi 0, %s67
      %s71 = sphi 0, %s70
      %s87 = sphi 0, %s71
      %s91 = sphi 0, %s91
      %s93 = sphi 0, %s91
      %s94 = sphi 0, %s93
      %s108 = sphi 0, %s94
      %s112 = sphi 0, %s112
      %s114 = sphi 0, %s112
      %s115 = sphi 0, %s114
      %s129 = sphi 0, %s115
      %s135 = sphi 0, %s137
      %s138 = sphi 0, %s135
      %s139 = sphi 0, %s138
      %s155 = sphi 0, %s139
    $region4: #{tpu_custom_call.1} parent=1 // loop_header_branch
      %20 = sbr.rel (%p18) target = $region8
    $region5: #{tpu_custom_call.1} parent=1 // loop_body
      %s22 = ssub.s32 %s17, 1
      %s23 = ssub.s32 %s17, 2
      %s30 = sadd.s32 1, %s25
      %p31 = scmp.ge.s32.totalorder %s30, 1
      %s32 = scalar_select %p31, 0, %s30
      %s33 = sadd.s32 1, %s24
      %s34 = scalar_select %p31, %s33, %s24
      %p35 = scmp.ge.s32.totalorder %s34, 2
      %s36 = scalar_select %p35, 0, %s34
      %s37 = ssub.s32 %s24, %s36
      %s38 = ssub.s32 %s25, %s32
      %s39 = sor.u32 %s37, %s38
      %p40 = scmp.eq.s32.totalorder %s39, 0
      %s42 = sadd.s32 %s41, 1
      %s43 = scalar_select %p40, %s41, %s42
      %p46 = pneg %p40
      %p47 = scmp.eq.s32.totalorder %s17, 1
      %p48 = por %p46, %p47
      %p49 = scmp.ne.s32.totalorder %s41, %s44
      %p50 = scmp.eq.s32.totalorder %s17, 0
      %p51 = por %p49, %p50
      %p52 = scmp.ne.s32.totalorder %s41, %s44
      %p53 = scmp.eq.s32.totalorder %s22, 1
      %p54 = por %p52, %p53
      %p55 = scmp.ne.s32.totalorder %s44, %s45
      %p56 = scmp.eq.s32.totalorder %s22, 0
      %p57 = por %p55, %p56
      %p58 = scmp.ne.s32.totalorder %s44, %s45
      %p59 = scmp.eq.s32.totalorder %s23, 1
      %p60 = por %p58, %p59
      %p62 = scmp.ne.s32.totalorder %s45, %s61
      %p63 = scmp.eq.s32.totalorder %s23, 0
      %p64 = por %p62, %p63
      %s65 = ssub.s32 %s25, %s32
      %p66 = scmp.eq.s32.totalorder %s65, 0
      %s68 = sadd.s32 %s67, 1
      %s69 = scalar_select %p66, %s67, %s68
      %p72 = pneg %p66
      %p73 = scmp.eq.s32.totalorder %s17, 1
      %p74 = por %p72, %p73
      %p75 = scmp.ne.s32.totalorder %s67, %s70
      %p76 = scmp.eq.s32.totalorder %s17, 0
      %p77 = por %p75, %p76
      %p78 = scmp.ne.s32.totalorder %s67, %s70
      %p79 = scmp.eq.s32.totalorder %s22, 1
      %p80 = por %p78, %p79
      %p81 = scmp.ne.s32.totalorder %s70, %s71
      %p82 = scmp.eq.s32.totalorder %s22, 0
      %p83 = por %p81, %p82
      %p84 = scmp.ne.s32.totalorder %s70, %s71
      %p85 = scmp.eq.s32.totalorder %s23, 1
      %p86 = por %p84, %p85
      %p88 = scmp.ne.s32.totalorder %s71, %s87
      %p89 = scmp.eq.s32.totalorder %s23, 0
      %p90 = por %p88, %p89
      %s92 = sadd.s32 %s91, 1
      %p95 = scmp.eq.s32.totalorder %s17, 1
      %p96 = scmp.ne.s32.totalorder %s91, %s93
      %p97 = scmp.eq.s32.totalorder %s17, 0
      %p98 = por %p96, %p97
      %p99 = scmp.ne.s32.totalorder %s91, %s93
      %p100 = scmp.eq.s32.totalorder %s22, 1
      %p101 = por %p99, %p100
      %p102 = scmp.ne.s32.totalorder %s93, %s94
      %p103 = scmp.eq.s32.totalorder %s22, 0
      %p104 = por %p102, %p103
      %p105 = scmp.ne.s32.totalorder %s93, %s94
      %p106 = scmp.eq.s32.totalorder %s23, 1
      %p107 = por %p105, %p106
      %p109 = scmp.ne.s32.totalorder %s94, %s108
      %p110 = scmp.eq.s32.totalorder %s23, 0
      %p111 = por %p109, %p110
      %s113 = sadd.s32 %s112, 1
      %p116 = scmp.eq.s32.totalorder %s17, 1
      %p117 = scmp.ne.s32.totalorder %s112, %s114
      %p118 = scmp.eq.s32.totalorder %s17, 0
      %p119 = por %p117, %p118
      %p120 = scmp.ne.s32.totalorder %s112, %s114
      %p121 = scmp.eq.s32.totalorder %s22, 1
      %p122 = por %p120, %p121
      %p123 = scmp.ne.s32.totalorder %s114, %s115
      %p124 = scmp.eq.s32.totalorder %s22, 0
      %p125 = por %p123, %p124
      %p126 = scmp.ne.s32.totalorder %s114, %s115
      %p127 = scmp.eq.s32.totalorder %s23, 1
      %p128 = por %p126, %p127
      %p130 = scmp.ne.s32.totalorder %s115, %s129
      %p131 = scmp.eq.s32.totalorder %s23, 0
      %p132 = por %p130, %p131
      %s133 = ssub.s32 %s24, %s36
      %p134 = scmp.eq.s32.totalorder %s133, 0
      %s136 = sadd.s32 %s135, 1
      %s137 = scalar_select %p134, %s135, %s136
      %p140 = pneg %p134
      %p141 = scmp.eq.s32.totalorder %s17, 1
      %p142 = por %p140, %p141
      %p143 = scmp.ne.s32.totalorder %s135, %s138
      %p144 = scmp.eq.s32.totalorder %s17, 0
      %p145 = por %p143, %p144
      %p146 = scmp.ne.s32.totalorder %s135, %s138
      %p147 = scmp.eq.s32.totalorder %s22, 1
      %p148 = por %p146, %p147
      %p149 = scmp.ne.s32.totalorder %s138, %s139
      %p150 = scmp.eq.s32.totalorder %s22, 0
      %p151 = por %p149, %p150
      %p152 = scmp.ne.s32.totalorder %s138, %s139
      %p153 = scmp.eq.s32.totalorder %s23, 1
      %p154 = por %p152, %p153
      %p156 = scmp.ne.s32.totalorder %s139, %s155
      %p157 = scmp.eq.s32.totalorder %s23, 0
      %p158 = por %p156, %p157
      %p159 = scmp.le.s32.totalorder 1, %s17
      %p160 = scmp.lt.s32.totalorder %s17, 3
      %p161 = pnand %p159, %p160
      %p162 = pneg %p161
      // Predicated region
      $region9: #{tpu_custom_call.1} parent=5 // pred_check
        _
      $region10: #{tpu_custom_call.1} parent=5 // pred_check_branch
        %164 = sbr.rel (%p161) target = $region12
      $region11: #{tpu_custom_call.1} parent=5 // pred_region
        %s165 = ssub.s32 %s17, 1
        // Predicated region
        $region13: #{tpu_custom_call.1} parent=11 // pred_check
          %p166 = pneg %p83
        $region14: #{tpu_custom_call.1} parent=11 // pred_check_branch
          %168 = sbr.rel (%p166) target = $region16
        $region15: #{tpu_custom_call.1} parent=11 // pred_region
          %s169 = smul.u32 16, %s27
          %s171 = ssub.s32 1024, 1024
          %172 = vsyncadd [#allocation7], %s171
          %s173 = smul.addr %s169, 64
          %s174 = scalar_lea.hbm %s1, %s173
          %s175 = sshll.u32 [#allocation6], 4
          %s176 = int_to_ptr.vmem [resolvable:$true] %s175
          %181 = dma.hbm_to_vmem [thread:$0]  %s174, 1024, %s176, [#allocation7], 64, 64, 4
        $region16: #{tpu_custom_call.1} parent=11 // pred_fallthru
          _
        // Predicated region
        $region17: #{tpu_custom_call.1} parent=11 // pred_check
          %p182 = pneg %p104
        $region18: #{tpu_custom_call.1} parent=11 // pred_check_branch
          %184 = sbr.rel (%p182) target = $region20
        $region19: #{tpu_custom_call.1} parent=11 // pred_region
          _
        $region20: #{tpu_custom_call.1} parent=11 // pred_fallthru
          _
        // Predicated region
        $region21: #{tpu_custom_call.1} parent=11 // pred_check
          %p185 = pneg %p125
        $region22: #{tpu_custom_call.1} parent=11 // pred_check_branch
          %187 = sbr.rel (%p185) target = $region24
        $region23: #{tpu_custom_call.1} parent=11 // pred_region
          _
        $region24: #{tpu_custom_call.1} parent=11 // pred_fallthru
          _
      $region12: #{tpu_custom_call.1} parent=5 // pred_fallthru
        _
      %p188 = scmp.lt.s32.totalorder %s17, 2
      // Predicated region
      $region25: #{tpu_custom_call.1} parent=5 // pred_check
        %p189 = pneg %p188
      $region26: #{tpu_custom_call.1} parent=5 // pred_check_branch
        %191 = sbr.rel (%p189) target = $region28
      $region27: #{tpu_custom_call.1} parent=5 // pred_region
        // Predicated region
        $region29: #{tpu_custom_call.1} parent=27 // pred_check
          %p192 = pneg %p51
        $region30: #{tpu_custom_call.1} parent=27 // pred_check_branch
          %194 = sbr.rel (%p192) target = $region32
        $region31: #{tpu_custom_call.1} parent=27 // pred_region
          %s195 = sand.u32 %s41, 1
          %s196 = scalar_lea.sflag [#allocation4], %s195
          %s197 = sand.u32 %s41, 1
          %s198 = smul.addr %s197, 128
          %s199 = scalar_lea.vmem [#allocation3], %s198
          %s200 = smul.u32 32, %s24
          %s202 = ssub.s32 2048, 2048
          %203 = vsyncadd %s196, %s202
          %s204 = sadd.s32 %s25, %s200
          %s205 = smul.addr %s204, 64
          %s206 = scalar_lea.hbm %s0, %s205
          %s207 = sshll.u32 %s199, 4
          %s208 = int_to_ptr.vmem [resolvable:$true] %s207
          %213 = dma.hbm_to_vmem [thread:$0]  %s206, 2048, %s208, %s196, 64, 64, 4
        $region32: #{tpu_custom_call.1} parent=27 // pred_fallthru
          _
      $region28: #{tpu_custom_call.1} parent=5 // pred_fallthru
        _
      %p214 = scmp.le.s32.totalorder 1, %s17
      %p215 = scmp.lt.s32.totalorder %s17, 3
      %p216 = pnand %p214, %p215
      %p217 = pneg %p216
      // Predicated region
      $region33: #{tpu_custom_call.1} parent=5 // pred_check
        _
      $region34: #{tpu_custom_call.1} parent=5 // pred_check_branch
        %219 = sbr.rel (%p216) target = $region36
      $region35: #{tpu_custom_call.1} parent=5 // pred_region
        %s220 = ssub.s32 %s17, 1
        %s221 = sand.u32 %s44, 1
        %s222 = scalar_lea.sflag [#allocation4], %s221
        %s223 = sand.u32 %s44, 1
        %s224 = smul.addr %s223, 128
        %s225 = scalar_lea.vmem [#allocation3], %s224
        // Predicated region
        $region37: #{tpu_custom_call.1} parent=35 // pred_check
          %p226 = pneg %p57
        $region38: #{tpu_custom_call.1} parent=35 // pred_check_branch
          %228 = sbr.rel (%p226) target = $region40
        $region39: #{tpu_custom_call.1} parent=35 // pred_region
          %229 = dma.done %s222, 2048
        $region40: #{tpu_custom_call.1} parent=35 // pred_fallthru
          _
        // Predicated region
        $region41: #{tpu_custom_call.1} parent=35 // pred_check
          %p230 = pneg %p83
        $region42: #{tpu_custom_call.1} parent=35 // pred_check_branch
          %232 = sbr.rel (%p230) target = $region44
        $region43: #{tpu_custom_call.1} parent=35 // pred_region
          %233 = dma.done [#allocation7], 1024
        $region44: #{tpu_custom_call.1} parent=35 // pred_fallthru
          _
        %s234 = sand.u32 %s44, 1
        %s235 = scalar_lea.sflag [#allocation4], %s234
        %s236 = sand.u32 %s44, 1
        %s237 = smul.addr %s236, 128
        %s238 = scalar_lea.vmem [#allocation3], %s237
        %p239 = pneg %p57
        %p240 = pneg %p54
        %p241 = pneg %p83
        %p242 = pneg %p80
        %p243 = pneg %p104
        %p244 = pneg %p101
        %p245 = pneg %p125
        %p246 = pneg %p122
        %p247 = pneg %p151
        %p248 = pneg %p148
        %s249 = sand.u32 %s138, 1
        %s250 = scalar_lea.sflag [#allocation5], %s249
        %s251 = sand.u32 %s138, 1
        %s252 = smul.addr %s251, 128
        %s253 = scalar_lea.vmem [#allocation8], %s252
        %s254 = smul.u32 32, %s26
        %s255 = smul.u32 16, %s27
        %s256 = smul.u32 32, %s26
        %p258 = scmp.eq.s32.totalorder %s27, 0
        // Predicated region
        $region45: #{tpu_custom_call.1} parent=35 // pred_check
          %p259 = pneg %p258
        $region46: #{tpu_custom_call.1} parent=35 // pred_check_branch
          %261 = sbr.rel (%p259) target = $region48
        $region47: #{tpu_custom_call.1} parent=35 // pred_region
          %262 = vst [vmem:[#allocation2] sm:$0xff] 0.0
          %263 = vst [vmem:[#allocation2 + $0x8] sm:$0xff] 0.0
          %264 = vst [vmem:[#allocation2 + $0x10] sm:$0xff] 0.0
          %265 = vst [vmem:[#allocation2 + $0x18] sm:$0xff] 0.0
          %266 = vst [vmem:[#allocation2 + $0x20] sm:$0xff] 0.0
          %267 = vst [vmem:[#allocation2 + $0x28] sm:$0xff] 0.0
          %268 = vst [vmem:[#allocation2 + $0x30] sm:$0xff] 0.0
          %269 = vst [vmem:[#allocation2 + $0x38] sm:$0xff] 0.0
          %270 = vst [vmem:[#allocation2 + $0x40] sm:$0xff] 0.0
          %271 = vst [vmem:[#allocation2 + $0x48] sm:$0xff] 0.0
          %272 = vst [vmem:[#allocation2 + $0x50] sm:$0xff] 0.0
          %273 = vst [vmem:[#allocation2 + $0x58] sm:$0xff] 0.0
          %274 = vst [vmem:[#allocation2 + $0x60] sm:$0xff] 0.0
          %275 = vst [vmem:[#allocation2 + $0x68] sm:$0xff] 0.0
          %276 = vst [vmem:[#allocation2 + $0x70] sm:$0xff] 0.0
          %277 = vst [vmem:[#allocation2 + $0x78] sm:$0xff] 0.0
          %278 = vst [vmem:[#allocation2 + $0x80] sm:$0xff] 0.0
          %279 = vst [vmem:[#allocation2 + $0x88] sm:$0xff] 0.0
          %280 = vst [vmem:[#allocation2 + $0x90] sm:$0xff] 0.0
          %281 = vst [vmem:[#allocation2 + $0x98] sm:$0xff] 0.0
          %282 = vst [vmem:[#allocation2 + $0xa0] sm:$0xff] 0.0
          %283 = vst [vmem:[#allocation2 + $0xa8] sm:$0xff] 0.0
          %284 = vst [vmem:[#allocation2 + $0xb0] sm:$0xff] 0.0
          %285 = vst [vmem:[#allocation2 + $0xb8] sm:$0xff] 0.0
          %286 = vst [vmem:[#allocation2 + $0xc0] sm:$0xff] 0.0
          %287 = vst [vmem:[#allocation2 + $0xc8] sm:$0xff] 0.0
          %288 = vst [vmem:[#allocation2 + $0xd0] sm:$0xff] 0.0
          %289 = vst [vmem:[#allocation2 + $0xd8] sm:$0xff] 0.0
          %290 = vst [vmem:[#allocation2 + $0xe0] sm:$0xff] 0.0
          %291 = vst [vmem:[#allocation2 + $0xe8] sm:$0xff] 0.0
          %292 = vst [vmem:[#allocation2 + $0xf0] sm:$0xff] 0.0
          %293 = vst [vmem:[#allocation2 + $0xf8] sm:$0xff] 0.0
        $region48: #{tpu_custom_call.1} parent=35 // pred_fallthru
          _
        %v294 = vld [vmem:[#allocation2] sm:$0xff]
        %v295 = vld [vmem:[#allocation2 + $0x8] sm:$0xff]
        %v296 = vld [vmem:[#allocation2 + $0x10] sm:$0xff]
        %v297 = vld [vmem:[#allocation2 + $0x18] sm:$0xff]
        %v298 = vld [vmem:[#allocation2 + $0x20] sm:$0xff]
        %v299 = vld [vmem:[#allocation2 + $0x28] sm:$0xff]
        %v300 = vld [vmem:[#allocation2 + $0x30] sm:$0xff]
        %v301 = vld [vmem:[#allocation2 + $0x38] sm:$0xff]
        %v302 = vld [vmem:[#allocation2 + $0x40] sm:$0xff]
        %v303 = vld [vmem:[#allocation2 + $0x48] sm:$0xff]
        %v304 = vld [vmem:[#allocation2 + $0x50] sm:$0xff]
        %v305 = vld [vmem:[#allocation2 + $0x58] sm:$0xff]
        %v306 = vld [vmem:[#allocation2 + $0x60] sm:$0xff]
        %v307 = vld [vmem:[#allocation2 + $0x68] sm:$0xff]
        %v308 = vld [vmem:[#allocation2 + $0x70] sm:$0xff]
        %v309 = vld [vmem:[#allocation2 + $0x78] sm:$0xff]
        %v310 = vld [vmem:[#allocation2 + $0x80] sm:$0xff]
        %v311 = vld [vmem:[#allocation2 + $0x88] sm:$0xff]
        %v312 = vld [vmem:[#allocation2 + $0x90] sm:$0xff]
        %v313 = vld [vmem:[#allocation2 + $0x98] sm:$0xff]
        %v314 = vld [vmem:[#allocation2 + $0xa0] sm:$0xff]
        %v315 = vld [vmem:[#allocation2 + $0xa8] sm:$0xff]
        %v316 = vld [vmem:[#allocation2 + $0xb0] sm:$0xff]
        %v317 = vld [vmem:[#allocation2 + $0xb8] sm:$0xff]
        %v318 = vld [vmem:[#allocation2 + $0xc0] sm:$0xff]
        %v319 = vld [vmem:[#allocation2 + $0xc8] sm:$0xff]
        %v320 = vld [vmem:[#allocation2 + $0xd0] sm:$0xff]
        %v321 = vld [vmem:[#allocation2 + $0xd8] sm:$0xff]
        %v322 = vld [vmem:[#allocation2 + $0xe0] sm:$0xff]
        %v323 = vld [vmem:[#allocation2 + $0xe8] sm:$0xff]
        %v324 = vld [vmem:[#allocation2 + $0xf0] sm:$0xff]
        %v325 = vld [vmem:[#allocation2 + $0xf8] sm:$0xff]
        %v326 = vld [vmem:[%s225] sm:$0xf]
        %v327 = vld [vmem:[%s225 + $0x4] sm:$0xf]
        %v328 = vld [vmem:[%s225 + $0x8] sm:$0xf]
        %v329 = vld [vmem:[%s225 + $0xc] sm:$0xf]
        %v330 = vld [vmem:[%s225 + $0x10] sm:$0xf]
        %v331 = vld [vmem:[%s225 + $0x14] sm:$0xf]
        %v332 = vld [vmem:[%s225 + $0x18] sm:$0xf]
        %v333 = vld [vmem:[%s225 + $0x1c] sm:$0xf]
        %v334 = vld [vmem:[%s225 + $0x20] sm:$0xf]
        %v335 = vld [vmem:[%s225 + $0x24] sm:$0xf]
        %v336 = vld [vmem:[%s225 + $0x28] sm:$0xf]
        %v337 = vld [vmem:[%s225 + $0x2c] sm:$0xf]
        %v338 = vld [vmem:[%s225 + $0x30] sm:$0xf]
        %v339 = vld [vmem:[%s225 + $0x34] sm:$0xf]
        %v340 = vld [vmem:[%s225 + $0x38] sm:$0xf]
        %v341 = vld [vmem:[%s225 + $0x3c] sm:$0xf]
        %v342 = vld [vmem:[%s225 + $0x40] sm:$0xf]
        %v343 = vld [vmem:[%s225 + $0x44] sm:$0xf]
        %v344 = vld [vmem:[%s225 + $0x48] sm:$0xf]
        %v345 = vld [vmem:[%s225 + $0x4c] sm:$0xf]
        %v346 = vld [vmem:[%s225 + $0x50] sm:$0xf]
        %v347 = vld [vmem:[%s225 + $0x54] sm:$0xf]
        %v348 = vld [vmem:[%s225 + $0x58] sm:$0xf]
        %v349 = vld [vmem:[%s225 + $0x5c] sm:$0xf]
        %v350 = vld [vmem:[%s225 + $0x60] sm:$0xf]
        %v351 = vld [vmem:[%s225 + $0x64] sm:$0xf]
        %v352 = vld [vmem:[%s225 + $0x68] sm:$0xf]
        %v353 = vld [vmem:[%s225 + $0x6c] sm:$0xf]
        %v354 = vld [vmem:[%s225 + $0x70] sm:$0xf]
        %v355 = vld [vmem:[%s225 + $0x74] sm:$0xf]
        %v356 = vld [vmem:[%s225 + $0x78] sm:$0xf]
        %v357 = vld [vmem:[%s225 + $0x7c] sm:$0xf]
        %v358 = vld [vmem:[#allocation6] sm:$0xf]
        %v359 = vld [vmem:[#allocation6 + $0x4] sm:$0xf]
        %v360 = vld [vmem:[#allocation6 + $0x8] sm:$0xf]
        %v361 = vld [vmem:[#allocation6 + $0xc] sm:$0xf]
        %v362 = vld [vmem:[#allocation6 + $0x10] sm:$0xf]
        %v363 = vld [vmem:[#allocation6 + $0x14] sm:$0xf]
        %v364 = vld [vmem:[#allocation6 + $0x18] sm:$0xf]
        %v365 = vld [vmem:[#allocation6 + $0x1c] sm:$0xf]
        %v366 = vld [vmem:[#allocation6 + $0x20] sm:$0xf]
        %v367 = vld [vmem:[#allocation6 + $0x24] sm:$0xf]
        %v368 = vld [vmem:[#allocation6 + $0x28] sm:$0xf]
        %v369 = vld [vmem:[#allocation6 + $0x2c] sm:$0xf]
        %v370 = vld [vmem:[#allocation6 + $0x30] sm:$0xf]
        %v371 = vld [vmem:[#allocation6 + $0x34] sm:$0xf]
        %v372 = vld [vmem:[#allocation6 + $0x38] sm:$0xf]
        %v373 = vld [vmem:[#allocation6 + $0x3c] sm:$0xf]
        %v406 = vunpack.c.l.b16 %v326
        %v407 = vunpack.c.l.b16 %v327
        %v408 = vunpack.c.l.b16 %v328
        %v409 = vunpack.c.l.b16 %v329
        %v410 = vunpack.c.l.b16 %v330
        %v411 = vunpack.c.l.b16 %v331
        %v412 = vunpack.c.l.b16 %v332
        %v413 = vunpack.c.l.b16 %v333
        %v414 = vunpack.c.l.b16 %v334
        %v415 = vunpack.c.l.b16 %v335
        %v416 = vunpack.c.l.b16 %v336
        %v417 = vunpack.c.l.b16 %v337
        %v418 = vunpack.c.l.b16 %v338
        %v419 = vunpack.c.l.b16 %v339
        %v420 = vunpack.c.l.b16 %v340
        %v421 = vunpack.c.l.b16 %v341
        %v422 = vunpack.c.l.b16 %v342
        %v423 = vunpack.c.l.b16 %v343
        %v424 = vunpack.c.l.b16 %v344
        %v425 = vunpack.c.l.b16 %v345
        %v426 = vunpack.c.l.b16 %v346
        %v427 = vunpack.c.l.b16 %v347
        %v428 = vunpack.c.l.b16 %v348
        %v429 = vunpack.c.l.b16 %v349
        %v430 = vunpack.c.l.b16 %v350
        %v431 = vunpack.c.l.b16 %v351
        %v432 = vunpack.c.l.b16 %v352
        %v433 = vunpack.c.l.b16 %v353
        %v434 = vunpack.c.l.b16 %v354
        %v435 = vunpack.c.l.b16 %v355
        %v436 = vunpack.c.l.b16 %v356
        %v437 = vunpack.c.l.b16 %v357
        %v438 = vpack.c.b16 %v407, %v406
        %v439 = vpack.c.b16 %v409, %v408
        %v440 = vpack.c.b16 %v411, %v410
        %v441 = vpack.c.b16 %v413, %v412
        %v442 = vpack.c.b16 %v415, %v414
        %v443 = vpack.c.b16 %v417, %v416
        %v444 = vpack.c.b16 %v419, %v418
        %v445 = vpack.c.b16 %v421, %v420
        %v446 = vpack.c.b16 %v423, %v422
        %v447 = vpack.c.b16 %v425, %v424
        %v448 = vpack.c.b16 %v427, %v426
        %v449 = vpack.c.b16 %v429, %v428
        %v450 = vpack.c.b16 %v431, %v430
        %v451 = vpack.c.b16 %v433, %v432
        %v452 = vpack.c.b16 %v435, %v434
        %v453 = vpack.c.b16 %v437, %v436
        %v486 = vunpack.c.l.b16 %v358
        %v487 = vunpack.c.l.b16 %v359
        %v488 = vunpack.c.l.b16 %v360
        %v489 = vunpack.c.l.b16 %v361
        %v490 = vunpack.c.l.b16 %v362
        %v491 = vunpack.c.l.b16 %v363
        %v492 = vunpack.c.l.b16 %v364
        %v493 = vunpack.c.l.b16 %v365
        %v494 = vunpack.c.l.b16 %v366
        %v495 = vunpack.c.l.b16 %v367
        %v496 = vunpack.c.l.b16 %v368
        %v497 = vunpack.c.l.b16 %v369
        %v498 = vunpack.c.l.b16 %v370
        %v499 = vunpack.c.l.b16 %v371
        %v500 = vunpack.c.l.b16 %v372
        %v501 = vunpack.c.l.b16 %v373
        %v502 = vpack.c.b16 %v487, %v486
        %v503 = vpack.c.b16 %v489, %v488
        %v504 = vpack.c.b16 %v491, %v490
        %v505 = vpack.c.b16 %v493, %v492
        %v506 = vpack.c.b16 %v495, %v494
        %v507 = vpack.c.b16 %v497, %v496
        %v508 = vpack.c.b16 %v499, %v498
        %v509 = vpack.c.b16 %v501, %v500
        %518 = vmatprep.subr.bf16.mxu0 0
        %519 = vmatpush1.bf16.msra.mxu0 %v502
        %520 = vmatprep.subr.bf16.mxu0 0
        %521 = vmatpush1.bf16.msra.mxu0 %v503
        %522 = vmatprep.subr.bf16.mxu0 0
        %523 = vmatpush1.bf16.msra.mxu0 %v504
        %524 = vmatprep.subr.bf16.mxu0 0
        %525 = vmatpush1.bf16.msra.mxu0 %v505
        %526 = vmatprep.subr.bf16.mxu0 0
        %527 = vmatpush1.bf16.msra.mxu0 %v506
        %528 = vmatprep.subr.bf16.mxu0 0
        %529 = vmatpush1.bf16.msra.mxu0 %v507
        %530 = vmatprep.subr.bf16.mxu0 0
        %531 = vmatpush1.bf16.msra.mxu0 %v508
        %532 = vmatprep.subr.bf16.mxu0 0
        %533 = vmatpush1.bf16.msra.mxu0 %v509
        %534 = vmatprep.subr.bf16.mxu0 0
        %535 = vmatpush1.bf16.msra.mxu0 0
        %536 = vmatprep.subr.bf16.mxu0 0
        %537 = vmatpush1.bf16.msra.mxu0 0
        %538 = vmatprep.subr.bf16.mxu0 0
        %539 = vmatpush1.bf16.msra.mxu0 0
        %540 = vmatprep.subr.bf16.mxu0 0
        %541 = vmatpush1.bf16.msra.mxu0 0
        %542 = vmatprep.subr.bf16.mxu0 0
        %543 = vmatpush1.bf16.msra.mxu0 0
        %544 = vmatprep.subr.bf16.mxu0 0
        %545 = vmatpush1.bf16.msra.mxu0 0
        %546 = vmatprep.subr.bf16.mxu0 0
        %547 = vmatpush1.bf16.msra.mxu0 0
        %548 = vmatprep.subr.bf16.mxu0 0
        %549 = vmatpush1.bf16.msra.mxu0 0
        %550 = vmatprep.mubr.bf16.mxu0 0
        %551 = vmatmul.mubr.bf16.gmra.mrb[0].mxu0 %v438
        %v552 = vpop.f32.mrb[0].mxu0
        %v553 = vadd.f32 0.0, %v552
        %v554 = vpop.f32.mrb[0].mxu0
        %v555 = vpop.f32.mrb[0].mxu0
        %v556 = vadd.f32 0.0, %v555
        %v557 = vpop.f32.mrb[0].mxu0
        %558 = vmatprep.mubr.bf16.mxu0 0
        %559 = vmatmul.mubr.bf16.gmra.mrb[0].mxu0 %v439
        %v560 = vpop.f32.mrb[0].mxu0
        %v561 = vadd.f32 0.0, %v560
        %v562 = vpop.f32.mrb[0].mxu0
        %v563 = vpop.f32.mrb[0].mxu0
        %v564 = vadd.f32 0.0, %v563
        %v565 = vpop.f32.mrb[0].mxu0
        %566 = vmatprep.mubr.bf16.mxu0 0
        %567 = vmatmul.mubr.bf16.gmra.mrb[0].mxu0 %v440
        %v568 = vpop.f32.mrb[0].mxu0
        %v569 = vadd.f32 0.0, %v568
        %v570 = vpop.f32.mrb[0].mxu0
        %v571 = vpop.f32.mrb[0].mxu0
        %v572 = vadd.f32 0.0, %v571
        %v573 = vpop.f32.mrb[0].mxu0
        %574 = vmatprep.mubr.bf16.mxu0 0
        %575 = vmatmul.mubr.bf16.gmra.mrb[0].mxu0 %v441
        %v576 = vpop.f32.mrb[0].mxu0
        %v577 = vadd.f32 0.0, %v576
        %v578 = vpop.f32.mrb[0].mxu0
        %v579 = vpop.f32.mrb[0].mxu0
        %v580 = vadd.f32 0.0, %v579
        %v581 = vpop.f32.mrb[0].mxu0
        %582 = vmatprep.mubr.bf16.mxu0 0
        %583 = vmatmul.mubr.bf16.gmra.mrb[0].mxu0 %v442
        %v584 = vpop.f32.mrb[0].mxu0
        %v585 = vadd.f32 0.0, %v584
        %v586 = vpop.f32.mrb[0].mxu0
        %v587 = vpop.f32.mrb[0].mxu0
        %v588 = vadd.f32 0.0, %v587
        %v589 = vpop.f32.mrb[0].mxu0
        %590 = vmatprep.mubr.bf16.mxu0 0
        %591 = vmatmul.mubr.bf16.gmra.mrb[0].mxu0 %v443
        %v592 = vpop.f32.mrb[0].mxu0
        %v593 = vadd.f32 0.0, %v592
        %v594 = vpop.f32.mrb[0].mxu0
        %v595 = vpop.f32.mrb[0].mxu0
        %v596 = vadd.f32 0.0, %v595
        %v597 = vpop.f32.mrb[0].mxu0
        %598 = vmatprep.mubr.bf16.mxu0 0
        %599 = vmatmul.mubr.bf16.gmra.mrb[0].mxu0 %v444
        %v600 = vpop.f32.mrb[0].mxu0
        %v601 = vadd.f32 0.0, %v600
        %v602 = vpop.f32.mrb[0].mxu0
        %v603 = vpop.f32.mrb[0].mxu0
        %v604 = vadd.f32 0.0, %v603
        %v605 = vpop.f32.mrb[0].mxu0
        %606 = vmatprep.mubr.bf16.mxu0 0
        %607 = vmatmul.mubr.bf16.gmra.mrb[0].mxu0 %v445
        %v608 = vpop.f32.mrb[0].mxu0
        %v609 = vadd.f32 0.0, %v608
        %v610 = vpop.f32.mrb[0].mxu0
        %v611 = vpop.f32.mrb[0].mxu0
        %v612 = vadd.f32 0.0, %v611
        %v613 = vpop.f32.mrb[0].mxu0
        %614 = vmatprep.mubr.bf16.mxu0 0
        %615 = vmatmul.mubr.bf16.gmra.mrb[0].mxu0 %v446
        %v616 = vpop.f32.mrb[0].mxu0
        %v617 = vadd.f32 0.0, %v616
        %v618 = vpop.f32.mrb[0].mxu0
        %v619 = vpop.f32.mrb[0].mxu0
        %v620 = vadd.f32 0.0, %v619
        %v621 = vpop.f32.mrb[0].mxu0
        %622 = vmatprep.mubr.bf16.mxu0 0
        %623 = vmatmul.mubr.bf16.gmra.mrb[0].mxu0 %v447
        %v624 = vpop.f32.mrb[0].mxu0
        %v625 = vadd.f32 0.0, %v624
        %v626 = vpop.f32.mrb[0].mxu0
        %v627 = vpop.f32.mrb[0].mxu0
        %v628 = vadd.f32 0.0, %v627
        %v629 = vpop.f32.mrb[0].mxu0
        %630 = vmatprep.mubr.bf16.mxu0 0
        %631 = vmatmul.mubr.bf16.gmra.mrb[0].mxu0 %v448
        %v632 = vpop.f32.mrb[0].mxu0
        %v633 = vadd.f32 0.0, %v632
        %v634 = vpop.f32.mrb[0].mxu0
        %v635 = vpop.f32.mrb[0].mxu0
        %v636 = vadd.f32 0.0, %v635
        %v637 = vpop.f32.mrb[0].mxu0
        %638 = vmatprep.mubr.bf16.mxu0 0
        %639 = vmatmul.mubr.bf16.gmra.mrb[0].mxu0 %v449
        %v640 = vpop.f32.mrb[0].mxu0
        %v641 = vadd.f32 0.0, %v640
        %v642 = vpop.f32.mrb[0].mxu0
        %v643 = vpop.f32.mrb[0].mxu0
        %v644 = vadd.f32 0.0, %v643
        %v645 = vpop.f32.mrb[0].mxu0
        %646 = vmatprep.mubr.bf16.mxu0 0
        %647 = vmatmul.mubr.bf16.gmra.mrb[0].mxu0 %v450
        %v648 = vpop.f32.mrb[0].mxu0
        %v649 = vadd.f32 0.0, %v648
        %v650 = vpop.f32.mrb[0].mxu0
        %v651 = vpop.f32.mrb[0].mxu0
        %v652 = vadd.f32 0.0, %v651
        %v653 = vpop.f32.mrb[0].mxu0
        %654 = vmatprep.mubr.bf16.mxu0 0
        %655 = vmatmul.mubr.bf16.gmra.mrb[0].mxu0 %v451
        %v656 = vpop.f32.mrb[0].mxu0
        %v657 = vadd.f32 0.0, %v656
        %v658 = vpop.f32.mrb[0].mxu0
        %v659 = vpop.f32.mrb[0].mxu0
        %v660 = vadd.f32 0.0, %v659
        %v661 = vpop.f32.mrb[0].mxu0
        %662 = vmatprep.mubr.bf16.mxu0 0
        %663 = vmatmul.mubr.bf16.gmra.mrb[0].mxu0 %v452
        %v664 = vpop.f32.mrb[0].mxu0
        %v665 = vadd.f32 0.0, %v664
        %v666 = vpop.f32.mrb[0].mxu0
        %v667 = vpop.f32.mrb[0].mxu0
        %v668 = vadd.f32 0.0, %v667
        %v669 = vpop.f32.mrb[0].mxu0
        %670 = vmatprep.mubr.bf16.mxu0 0
        %671 = vmatmul.mubr.bf16.gmra.mrb[0].mxu0 %v453
        %v672 = vpop.f32.mrb[0].mxu0
        %v673 = vadd.f32 0.0, %v672
        %v674 = vpop.f32.mrb[0].mxu0
        %v675 = vpop.f32.mrb[0].mxu0
        %v676 = vadd.f32 0.0, %v675
        %v677 = vpop.f32.mrb[0].mxu0
        %678 = vdwg.mxu0
        %v679 = vadd.f32 %v294, %v553
        %v680 = vadd.f32 %v295, %v556
        %v681 = vadd.f32 %v296, %v561
        %v682 = vadd.f32 %v297, %v564
        %v683 = vadd.f32 %v298, %v569
        %v684 = vadd.f32 %v299, %v572
        %v685 = vadd.f32 %v300, %v577
        %v686 = vadd.f32 %v301, %v580
        %v687 = vadd.f32 %v302, %v585
        %v688 = vadd.f32 %v303, %v588
        %v689 = vadd.f32 %v304, %v593
        %v690 = vadd.f32 %v305, %v596
        %v691 = vadd.f32 %v306, %v601
        %v692 = vadd.f32 %v307, %v604
        %v693 = vadd.f32 %v308, %v609
        %v694 = vadd.f32 %v309, %v612
        %v695 = vadd.f32 %v310, %v617
        %v696 = vadd.f32 %v311, %v620
        %v697 = vadd.f32 %v312, %v625
        %v698 = vadd.f32 %v313, %v628
        %v699 = vadd.f32 %v314, %v633
        %v700 = vadd.f32 %v315, %v636
        %v701 = vadd.f32 %v316, %v641
        %v702 = vadd.f32 %v317, %v644
        %v703 = vadd.f32 %v318, %v649
        %v704 = vadd.f32 %v319, %v652
        %v705 = vadd.f32 %v320, %v657
        %v706 = vadd.f32 %v321, %v660
        %v707 = vadd.f32 %v322, %v665
        %v708 = vadd.f32 %v323, %v668
        %v709 = vadd.f32 %v324, %v673
        %v710 = vadd.f32 %v325, %v676
        %711 = vst [vmem:[#allocation2] sm:$0xff] %v679
        %712 = vst [vmem:[#allocation2 + $0x8] sm:$0xff] %v680
        %713 = vst [vmem:[#allocation2 + $0x10] sm:$0xff] %v681
        %714 = vst [vmem:[#allocation2 + $0x18] sm:$0xff] %v682
        %715 = vst [vmem:[#allocation2 + $0x20] sm:$0xff] %v683
        %716 = vst [vmem:[#allocation2 + $0x28] sm:$0xff] %v684
        %717 = vst [vmem:[#allocation2 + $0x30] sm:$0xff] %v685
        %718 = vst [vmem:[#allocation2 + $0x38] sm:$0xff] %v686
        %719 = vst [vmem:[#allocation2 + $0x40] sm:$0xff] %v687
        %720 = vst [vmem:[#allocation2 + $0x48] sm:$0xff] %v688
        %721 = vst [vmem:[#allocation2 + $0x50] sm:$0xff] %v689
        %722 = vst [vmem:[#allocation2 + $0x58] sm:$0xff] %v690
        %723 = vst [vmem:[#allocation2 + $0x60] sm:$0xff] %v691
        %724 = vst [vmem:[#allocation2 + $0x68] sm:$0xff] %v692
        %725 = vst [vmem:[#allocation2 + $0x70] sm:$0xff] %v693
        %726 = vst [vmem:[#allocation2 + $0x78] sm:$0xff] %v694
        %727 = vst [vmem:[#allocation2 + $0x80] sm:$0xff] %v695
        %728 = vst [vmem:[#allocation2 + $0x88] sm:$0xff] %v696
        %729 = vst [vmem:[#allocation2 + $0x90] sm:$0xff] %v697
        %730 = vst [vmem:[#allocation2 + $0x98] sm:$0xff] %v698
        %731 = vst [vmem:[#allocation2 + $0xa0] sm:$0xff] %v699
        %732 = vst [vmem:[#allocation2 + $0xa8] sm:$0xff] %v700
        %733 = vst [vmem:[#allocation2 + $0xb0] sm:$0xff] %v701
        %734 = vst [vmem:[#allocation2 + $0xb8] sm:$0xff] %v702
        %735 = vst [vmem:[#allocation2 + $0xc0] sm:$0xff] %v703
        %736 = vst [vmem:[#allocation2 + $0xc8] sm:$0xff] %v704
        %737 = vst [vmem:[#allocation2 + $0xd0] sm:$0xff] %v705
        %738 = vst [vmem:[#allocation2 + $0xd8] sm:$0xff] %v706
        %739 = vst [vmem:[#allocation2 + $0xe0] sm:$0xff] %v707
        %740 = vst [vmem:[#allocation2 + $0xe8] sm:$0xff] %v708
        %741 = vst [vmem:[#allocation2 + $0xf0] sm:$0xff] %v709
        %742 = vst [vmem:[#allocation2 + $0xf8] sm:$0xff] %v710
        // Predicated region
        $region49: #{tpu_custom_call.1} parent=35 // pred_check
          %p743 = pneg %p258
        $region50: #{tpu_custom_call.1} parent=35 // pred_check_branch
          %745 = sbr.rel (%p743) target = $region52
        $region51: #{tpu_custom_call.1} parent=35 // pred_region
          %v746 = vld [vmem:[#allocation2] sm:$0xff]
          %v747 = vld [vmem:[#allocation2 + $0x8] sm:$0xff]
          %v748 = vld [vmem:[#allocation2 + $0x10] sm:$0xff]
          %v749 = vld [vmem:[#allocation2 + $0x18] sm:$0xff]
          %v750 = vld [vmem:[#allocation2 + $0x20] sm:$0xff]
          %v751 = vld [vmem:[#allocation2 + $0x28] sm:$0xff]
          %v752 = vld [vmem:[#allocation2 + $0x30] sm:$0xff]
          %v753 = vld [vmem:[#allocation2 + $0x38] sm:$0xff]
          %v754 = vld [vmem:[#allocation2 + $0x40] sm:$0xff]
          %v755 = vld [vmem:[#allocation2 + $0x48] sm:$0xff]
          %v756 = vld [vmem:[#allocation2 + $0x50] sm:$0xff]
          %v757 = vld [vmem:[#allocation2 + $0x58] sm:$0xff]
          %v758 = vld [vmem:[#allocation2 + $0x60] sm:$0xff]
          %v759 = vld [vmem:[#allocation2 + $0x68] sm:$0xff]
          %v760 = vld [vmem:[#allocation2 + $0x70] sm:$0xff]
          %v761 = vld [vmem:[#allocation2 + $0x78] sm:$0xff]
          %v762 = vld [vmem:[#allocation2 + $0x80] sm:$0xff]
          %v763 = vld [vmem:[#allocation2 + $0x88] sm:$0xff]
          %v764 = vld [vmem:[#allocation2 + $0x90] sm:$0xff]
          %v765 = vld [vmem:[#allocation2 + $0x98] sm:$0xff]
          %v766 = vld [vmem:[#allocation2 + $0xa0] sm:$0xff]
          %v767 = vld [vmem:[#allocation2 + $0xa8] sm:$0xff]
          %v768 = vld [vmem:[#allocation2 + $0xb0] sm:$0xff]
          %v769 = vld [vmem:[#allocation2 + $0xb8] sm:$0xff]
          %v770 = vld [vmem:[#allocation2 + $0xc0] sm:$0xff]
          %v771 = vld [vmem:[#allocation2 + $0xc8] sm:$0xff]
          %v772 = vld [vmem:[#allocation2 + $0xd0] sm:$0xff]
          %v773 = vld [vmem:[#allocation2 + $0xd8] sm:$0xff]
          %v774 = vld [vmem:[#allocation2 + $0xe0] sm:$0xff]
          %v775 = vld [vmem:[#allocation2 + $0xe8] sm:$0xff]
          %v776 = vld [vmem:[#allocation2 + $0xf0] sm:$0xff]
          %v777 = vld [vmem:[#allocation2 + $0xf8] sm:$0xff]
          %v778 = vld [vmem:[%s2] sm:$0x1]
          %v780 = vlaneseq
          %v781 = vshrl.u32 %v780, 7
          %v782 = vsub.s32 0, %v781
          %v783 = vrot.slane %v778, %v782
          %v785 = vmul.f32 %v746, %v783
          %v786 = vmul.f32 %v747, %v783
          %v787 = vmul.f32 %v748, %v783
          %v788 = vmul.f32 %v749, %v783
          %v789 = vmul.f32 %v750, %v783
          %v790 = vmul.f32 %v751, %v783
          %v791 = vmul.f32 %v752, %v783
          %v792 = vmul.f32 %v753, %v783
          %v793 = vmul.f32 %v754, %v783
          %v794 = vmul.f32 %v755, %v783
          %v795 = vmul.f32 %v756, %v783
          %v796 = vmul.f32 %v757, %v783
          %v797 = vmul.f32 %v758, %v783
          %v798 = vmul.f32 %v759, %v783
          %v799 = vmul.f32 %v760, %v783
          %v800 = vmul.f32 %v761, %v783
          %v801 = vmul.f32 %v762, %v783
          %v802 = vmul.f32 %v763, %v783
          %v803 = vmul.f32 %v764, %v783
          %v804 = vmul.f32 %v765, %v783
          %v805 = vmul.f32 %v766, %v783
          %v806 = vmul.f32 %v767, %v783
          %v807 = vmul.f32 %v768, %v783
          %v808 = vmul.f32 %v769, %v783
          %v809 = vmul.f32 %v770, %v783
          %v810 = vmul.f32 %v771, %v783
          %v811 = vmul.f32 %v772, %v783
          %v812 = vmul.f32 %v773, %v783
          %v813 = vmul.f32 %v774, %v783
          %v814 = vmul.f32 %v775, %v783
          %v815 = vmul.f32 %v776, %v783
          %v816 = vmul.f32 %v777, %v783
          %v817 = vld [vmem:[%s3] sm:$0x1]
          %v819 = vlaneseq
          %v820 = vshrl.u32 %v819, 7
          %v821 = vsub.s32 0, %v820
          %v822 = vrot.slane %v817, %v821
          %v824 = vadd.f32 %v785, %v822
          %v825 = vadd.f32 %v786, %v822
          %v826 = vadd.f32 %v787, %v822
          %v827 = vadd.f32 %v788, %v822
          %v828 = vadd.f32 %v789, %v822
          %v829 = vadd.f32 %v790, %v822
          %v830 = vadd.f32 %v791, %v822
          %v831 = vadd.f32 %v792, %v822
          %v832 = vadd.f32 %v793, %v822
          %v833 = vadd.f32 %v794, %v822
          %v834 = vadd.f32 %v795, %v822
          %v835 = vadd.f32 %v796, %v822
          %v836 = vadd.f32 %v797, %v822
          %v837 = vadd.f32 %v798, %v822
          %v838 = vadd.f32 %v799, %v822
          %v839 = vadd.f32 %v800, %v822
          %v840 = vadd.f32 %v801, %v822
          %v841 = vadd.f32 %v802, %v822
          %v842 = vadd.f32 %v803, %v822
          %v843 = vadd.f32 %v804, %v822
          %v844 = vadd.f32 %v805, %v822
          %v845 = vadd.f32 %v806, %v822
          %v846 = vadd.f32 %v807, %v822
          %v847 = vadd.f32 %v808, %v822
          %v848 = vadd.f32 %v809, %v822
          %v849 = vadd.f32 %v810, %v822
          %v850 = vadd.f32 %v811, %v822
          %v851 = vadd.f32 %v812, %v822
          %v852 = vadd.f32 %v813, %v822
          %v853 = vadd.f32 %v814, %v822
          %v854 = vadd.f32 %v815, %v822
          %v855 = vadd.f32 %v816, %v822
          %v856 = vmax.f32 %v824, 0.0
          %v857 = vmax.f32 %v825, 0.0
          %v858 = vmax.f32 %v826, 0.0
          %v859 = vmax.f32 %v827, 0.0
          %v860 = vmax.f32 %v828, 0.0
          %v861 = vmax.f32 %v829, 0.0
          %v862 = vmax.f32 %v830, 0.0
          %v863 = vmax.f32 %v831, 0.0
          %v864 = vmax.f32 %v832, 0.0
          %v865 = vmax.f32 %v833, 0.0
          %v866 = vmax.f32 %v834, 0.0
          %v867 = vmax.f32 %v835, 0.0
          %v868 = vmax.f32 %v836, 0.0
          %v869 = vmax.f32 %v837, 0.0
          %v870 = vmax.f32 %v838, 0.0
          %v871 = vmax.f32 %v839, 0.0
          %v872 = vmax.f32 %v840, 0.0
          %v873 = vmax.f32 %v841, 0.0
          %v874 = vmax.f32 %v842, 0.0
          %v875 = vmax.f32 %v843, 0.0
          %v876 = vmax.f32 %v844, 0.0
          %v877 = vmax.f32 %v845, 0.0
          %v878 = vmax.f32 %v846, 0.0
          %v879 = vmax.f32 %v847, 0.0
          %v880 = vmax.f32 %v848, 0.0
          %v881 = vmax.f32 %v849, 0.0
          %v882 = vmax.f32 %v850, 0.0
          %v883 = vmax.f32 %v851, 0.0
          %v884 = vmax.f32 %v852, 0.0
          %v885 = vmax.f32 %v853, 0.0
          %v886 = vmax.f32 %v854, 0.0
          %v887 = vmax.f32 %v855, 0.0
          %v888 = vpack.c.bf16 %v857, %v856
          %v889 = vpack.c.bf16 %v859, %v858
          %v890 = vpack.c.bf16 %v861, %v860
          %v891 = vpack.c.bf16 %v863, %v862
          %v892 = vpack.c.bf16 %v865, %v864
          %v893 = vpack.c.bf16 %v867, %v866
          %v894 = vpack.c.bf16 %v869, %v868
          %v895 = vpack.c.bf16 %v871, %v870
          %v896 = vpack.c.bf16 %v873, %v872
          %v897 = vpack.c.bf16 %v875, %v874
          %v898 = vpack.c.bf16 %v877, %v876
          %v899 = vpack.c.bf16 %v879, %v878
          %v900 = vpack.c.bf16 %v881, %v880
          %v901 = vpack.c.bf16 %v883, %v882
          %v902 = vpack.c.bf16 %v885, %v884
          %v903 = vpack.c.bf16 %v887, %v886
          %v920 = vunpack.c.l.b16 %v888
          %v921 = vunpack.c.h.b16 %v888
          %v922 = vunpack.c.l.b16 %v889
          %v923 = vunpack.c.h.b16 %v889
          %v924 = vunpack.c.l.b16 %v890
          %v925 = vunpack.c.h.b16 %v890
          %v926 = vunpack.c.l.b16 %v891
          %v927 = vunpack.c.h.b16 %v891
          %v928 = vunpack.c.l.b16 %v892
          %v929 = vunpack.c.h.b16 %v892
          %v930 = vunpack.c.l.b16 %v893
          %v931 = vunpack.c.h.b16 %v893
          %v932 = vunpack.c.l.b16 %v894
          %v933 = vunpack.c.h.b16 %v894
          %v934 = vunpack.c.l.b16 %v895
          %v935 = vunpack.c.h.b16 %v895
          %v936 = vunpack.c.l.b16 %v896
          %v937 = vunpack.c.h.b16 %v896
          %v938 = vunpack.c.l.b16 %v897
          %v939 = vunpack.c.h.b16 %v897
          %v940 = vunpack.c.l.b16 %v898
          %v941 = vunpack.c.h.b16 %v898
          %v942 = vunpack.c.l.b16 %v899
          %v943 = vunpack.c.h.b16 %v899
          %v944 = vunpack.c.l.b16 %v900
          %v945 = vunpack.c.h.b16 %v900
          %v946 = vunpack.c.l.b16 %v901
          %v947 = vunpack.c.h.b16 %v901
          %v948 = vunpack.c.l.b16 %v902
          %v949 = vunpack.c.h.b16 %v902
          %v950 = vunpack.c.l.b16 %v903
          %v951 = vunpack.c.h.b16 %v903
          %v952 = vpack.c.b16 %v920, %v920
          %v953 = vpack.c.b16 %v921, %v921
          %v954 = vpack.c.b16 %v922, %v922
          %v955 = vpack.c.b16 %v923, %v923
          %v956 = vpack.c.b16 %v924, %v924
          %v957 = vpack.c.b16 %v925, %v925
          %v958 = vpack.c.b16 %v926, %v926
          %v959 = vpack.c.b16 %v927, %v927
          %v960 = vpack.c.b16 %v928, %v928
          %v961 = vpack.c.b16 %v929, %v929
          %v962 = vpack.c.b16 %v930, %v930
          %v963 = vpack.c.b16 %v931, %v931
          %v964 = vpack.c.b16 %v932, %v932
          %v965 = vpack.c.b16 %v933, %v933
          %v966 = vpack.c.b16 %v934, %v934
          %v967 = vpack.c.b16 %v935, %v935
          %v968 = vpack.c.b16 %v936, %v936
          %v969 = vpack.c.b16 %v937, %v937
          %v970 = vpack.c.b16 %v938, %v938
          %v971 = vpack.c.b16 %v939, %v939
          %v972 = vpack.c.b16 %v940, %v940
          %v973 = vpack.c.b16 %v941, %v941
          %v974 = vpack.c.b16 %v942, %v942
          %v975 = vpack.c.b16 %v943, %v943
          %v976 = vpack.c.b16 %v944, %v944
          %v977 = vpack.c.b16 %v945, %v945
          %v978 = vpack.c.b16 %v946, %v946
          %v979 = vpack.c.b16 %v947, %v947
          %v980 = vpack.c.b16 %v948, %v948
          %v981 = vpack.c.b16 %v949, %v949
          %v982 = vpack.c.b16 %v950, %v950
          %v983 = vpack.c.b16 %v951, %v951
          %1016 = vst [vmem:[%s253] sm:$0xf] %v952
          %1017 = vst [vmem:[%s253 + $0x4] sm:$0xf] %v953
          %1018 = vst [vmem:[%s253 + $0x8] sm:$0xf] %v954
          %1019 = vst [vmem:[%s253 + $0xc] sm:$0xf] %v955
          %1020 = vst [vmem:[%s253 + $0x10] sm:$0xf] %v956
          %1021 = vst [vmem:[%s253 + $0x14] sm:$0xf] %v957
          %1022 = vst [vmem:[%s253 + $0x18] sm:$0xf] %v958
          %1023 = vst [vmem:[%s253 + $0x1c] sm:$0xf] %v959
          %1024 = vst [vmem:[%s253 + $0x20] sm:$0xf] %v960
          %1025 = vst [vmem:[%s253 + $0x24] sm:$0xf] %v961
          %1026 = vst [vmem:[%s253 + $0x28] sm:$0xf] %v962
          %1027 = vst [vmem:[%s253 + $0x2c] sm:$0xf] %v963
          %1028 = vst [vmem:[%s253 + $0x30] sm:$0xf] %v964
          %1029 = vst [vmem:[%s253 + $0x34] sm:$0xf] %v965
          %1030 = vst [vmem:[%s253 + $0x38] sm:$0xf] %v966
          %1031 = vst [vmem:[%s253 + $0x3c] sm:$0xf] %v967
          %1032 = vst [vmem:[%s253 + $0x40] sm:$0xf] %v968
          %1033 = vst [vmem:[%s253 + $0x44] sm:$0xf] %v969
          %1034 = vst [vmem:[%s253 + $0x48] sm:$0xf] %v970
          %1035 = vst [vmem:[%s253 + $0x4c] sm:$0xf] %v971
          %1036 = vst [vmem:[%s253 + $0x50] sm:$0xf] %v972
          %1037 = vst [vmem:[%s253 + $0x54] sm:$0xf] %v973
          %1038 = vst [vmem:[%s253 + $0x58] sm:$0xf] %v974
          %1039 = vst [vmem:[%s253 + $0x5c] sm:$0xf] %v975
          %1040 = vst [vmem:[%s253 + $0x60] sm:$0xf] %v976
          %1041 = vst [vmem:[%s253 + $0x64] sm:$0xf] %v977
          %1042 = vst [vmem:[%s253 + $0x68] sm:$0xf] %v978
          %1043 = vst [vmem:[%s253 + $0x6c] sm:$0xf] %v979
          %1044 = vst [vmem:[%s253 + $0x70] sm:$0xf] %v980
          %1045 = vst [vmem:[%s253 + $0x74] sm:$0xf] %v981
          %1046 = vst [vmem:[%s253 + $0x78] sm:$0xf] %v982
          %1047 = vst [vmem:[%s253 + $0x7c] sm:$0xf] %v983
        $region52: #{tpu_custom_call.1} parent=35 // pred_fallthru
          _
        %s1048 = sand.u32 %s138, 1
        %s1049 = scalar_lea.sflag [#allocation5], %s1048
        %s1050 = sand.u32 %s138, 1
        %s1051 = smul.addr %s1050, 128
        %s1052 = scalar_lea.vmem [#allocation8], %s1051
        // Predicated region
        $region53: #{tpu_custom_call.1} parent=35 // pred_check
          %p1053 = pneg %p148
        $region54: #{tpu_custom_call.1} parent=35 // pred_check_branch
          %1055 = sbr.rel (%p1053) target = $region56
        $region55: #{tpu_custom_call.1} parent=35 // pred_region
          %s1056 = smul.u32 32, %s26
          %s1058 = ssub.s32 2048, 2048
          %1059 = vsyncadd %s1049, %s1058
          %s1060 = smul.addr %s1056, 64
          %s1061 = scalar_lea.hbm %s4, %s1060
          %s1062 = sshll.u32 %s1052, 4
          %s1063 = int_to_ptr.vmem [resolvable:$true] %s1062
          %1068 = dma.vmem_to_hbm [thread:$0]  %s1063, 2048, %s1061, %s1049, 64, 64, 4
        $region56: #{tpu_custom_call.1} parent=35 // pred_fallthru
          _
      $region36: #{tpu_custom_call.1} parent=5 // pred_fallthru
        _
      %p1069 = scmp.le.s32.totalorder 2, %s17
      // Predicated region
      $region57: #{tpu_custom_call.1} parent=5 // pred_check
        %p1070 = pneg %p1069
      $region58: #{tpu_custom_call.1} parent=5 // pred_check_branch
        %1072 = sbr.rel (%p1070) target = $region60
      $region59: #{tpu_custom_call.1} parent=5 // pred_region
        %s1073 = ssub.s32 %s17, 2
        // Predicated region
        $region61: #{tpu_custom_call.1} parent=59 // pred_check
          %p1074 = pneg %p154
        $region62: #{tpu_custom_call.1} parent=59 // pred_check_branch
          %1076 = sbr.rel (%p1074) target = $region64
        $region63: #{tpu_custom_call.1} parent=59 // pred_region
          %s1077 = sand.u32 %s139, 1
          %s1078 = scalar_lea.sflag [#allocation5], %s1077
          %s1079 = sand.u32 %s139, 1
          %s1080 = smul.addr %s1079, 128
          %s1081 = scalar_lea.vmem [#allocation8], %s1080
          %1082 = dma.done %s1078, 2048
        $region64: #{tpu_custom_call.1} parent=59 // pred_fallthru
          _
      $region60: #{tpu_custom_call.1} parent=5 // pred_fallthru
        _
    $region6: #{tpu_custom_call.1} parent=1 // loop_footer
      %s21 = sadd.s32 1, %s17
    $region7: #{tpu_custom_call.1} parent=1 // loop_footer_branch
      %16 = sbr.rel target = $region3
    $region8: #{tpu_custom_call.1} parent=1 // loop_exit
      _
    %1083 = vsyncpa [#allocation4], 1
    %s1084 = scalar_lea.sflag [#allocation4], 1
    %1085 = vsyncpa %s1084, 1
    %1086 = vsyncpa [#allocation7], 1
    %1087 = vsyncpa [#allocation5], 1
    %s1088 = scalar_lea.sflag [#allocation5], 1
    %1089 = vsyncpa %s1088, 1

</llo_original>
